<compile_context>
chip_gen: v7x
topology: tpu7x:2x2x1
jax: 0.10.0
libtpu: 0.0.40
codegen_flags: <defaults>
</compile_context>

<pallas_src>
import functools
import math

import jax
import jax.numpy as jnp
from jax.experimental import pallas as pl
from jax.experimental.pallas import tpu as pltpu

BN_EPS = 1e-5
LANE = 128


def _cast(v, dt):
    return v if v.dtype == dt else v.astype(dt)


def _silu(h):
    # silu(h) = h * sigmoid(h) = 0.5*h*(tanh(0.5*h) + 1)  -- single EUP op.
    half = 0.5 * h
    return half * (jnp.tanh(half) + 1.0)


# ----------------------------- Pallas kernel ------------------------------ #

def top_layer_kernel(
    x_ref,
    w1_ref, b1_ref,
    w2_ref, b2_ref,
    w3_ref, b3_ref,
    w4_ref, b4_ref,
    o_ref,
):
    mm = w1_ref.dtype     # matmul input dtype (bf16 by default)
    ew = b1_ref.dtype     # elementwise (bias/SiLU) dtype (bf16 on v6e/v7x, f32 on v5e)

    h = _cast(x_ref[...], mm)
    # Blocks 1-3: (BN-folded) Linear + SiLU   (Dropout = identity in eval)
    for w_ref, b_ref in ((w1_ref, b1_ref), (w2_ref, b2_ref), (w3_ref, b3_ref)):
        acc = jnp.dot(h, w_ref[...], preferred_element_type=jnp.float32)
        h = _silu(_cast(acc, ew) + b_ref[...])
        h = _cast(h, mm)

    # Head: Linear(128, num_classes padded to 128 lanes); bias add in f32.
    out = jnp.dot(h, w4_ref[...], preferred_element_type=jnp.float32) + b4_ref[...]
    o_ref[...] = out.astype(o_ref.dtype)


# --------------------------- wrapper / factory ----------------------------- #

def _prepare_params(params, mm_dtype, ew_dtype):
    """Fold eval-mode BN into the preceding Linear, cast, pad head. Runs ONCE."""
    ordered = []
    for layer in (1, 2, 3):
        scale = params[f"g{layer}"] * jax.lax.rsqrt(params[f"v{layer}"] + BN_EPS)
        w = (params[f"w{layer}"] * scale).astype(mm_dtype)
        b = ((params[f"b{layer}"] - params[f"m{layer}"]) * scale
             + params[f"be{layer}"]).astype(ew_dtype)
        ordered += [w, b]

    num_classes = params["w4"].shape[1]
    out_pad = max(LANE, ((num_classes + LANE - 1) // LANE) * LANE)
    w4 = jnp.zeros((params["w4"].shape[0], out_pad), jnp.float32)
    w4 = w4.at[:, :num_classes].set(params["w4"]).astype(mm_dtype)
    b4 = jnp.zeros((1, out_pad), jnp.float32).at[:, :num_classes].set(params["b4"])
    ordered += [w4, b4]
    return tuple(ordered), out_pad


def _auto_tile_b(B, in_features, use_bf16):
    mult = 16 if use_bf16 else 8      # bf16 packs 16 sublanes per vreg
    rup = lambda v, m: ((v + m - 1) // m) * m
    if B >= 16:
        tb = rup(-(-B // 2), mult)    # >= 2 grid steps -> both v7x TCs get work
    else:
        tb = rup(max(B, 1), mult)
    # Cap so the double-buffered f32 x tile stays <= ~8 MiB even for large backbones.
    cap = max(mult, (((8 << 20) // max(1, 2 * in_features * 4)) // mult) * mult)
    return max(mult, min(tb, 512, cap))


def make_top_layer(params, *, use_bf16=True, elementwise_bf16=None,
                   tile_b=None, out_bf16=False):
    """Prepare (fold/cast/pad) params once and return a jitted forward fn."""
    if elementwise_bf16 is None:
        kind = jax.devices()[0].device_kind.lower()
        elementwise_bf16 = use_bf16 and ("v5" not in kind)  # v5e: no bf16 VPU/EUP

    mm_dtype = jnp.bfloat16 if use_bf16 else jnp.float32
    ew_dtype = jnp.bfloat16 if (use_bf16 and elementwise_bf16) else jnp.float32
    out_dtype = jnp.bfloat16 if out_bf16 else jnp.float32

    in_features = params["w1"].shape[0]
    num_classes = params["w4"].shape[1]
    ordered, out_pad = _prepare_params(params, mm_dtype, ew_dtype)

    @jax.jit
    def forward(x, *prm):
        B = x.shape[0]
        tb = tile_b if tile_b is not None else _auto_tile_b(B, in_features, use_bf16)

        in_specs = [pl.BlockSpec((tb, in_features), lambda i: (i, 0))]
        # Params: full tensor each step, constant block index -> single buffer.
        in_specs += [
            pl.BlockSpec(p.shape, lambda i: (0, 0), pipeline_mode=pl.Buffered(1))
            for p in prm
        ]

        # VMEM budget: double-buffered x tile + single-buffered params
        # + double-buffered out tile, with headroom; clamp to [16, 64] MiB
        # (64 MiB = v7x physical VMEM per TC).
        x_bytes = 2 * tb * in_features * x.dtype.itemsize
        w_bytes = sum(math.prod(p.shape) * p.dtype.itemsize for p in prm)
        o_bytes = 2 * tb * out_pad * jnp.dtype(out_dtype).itemsize
        vmem_limit = int(1.5 * (x_bytes + w_bytes + o_bytes)) + (8 << 20)
        vmem_limit = max(16 << 20, min(vmem_limit, 64 << 20))

        out = pl.pallas_call(
            top_layer_kernel,
            out_shape=jax.ShapeDtypeStruct((B, out_pad), out_dtype),
            grid_spec=pltpu.PrefetchScalarGridSpec(
                num_scalar_prefetch=0,
                grid=(pl.cdiv(B, tb),),
                in_specs=in_specs,
                out_specs=pl.BlockSpec((tb, out_pad), lambda i: (i, 0)),
            ),
            compiler_params=pltpu.CompilerParams(
                dimension_semantics=("parallel",),
                vmem_limit_bytes=vmem_limit,
            ),
        )(x, *prm)
        return out[:, :num_classes]

    def fn(x):
        return forward(x, *ordered)

    return fn


# ------------------------------- references -------------------------------- #

def init_params(key, in_features, num_classes):
    """Deterministic parameter init mirroring the PyTorch module's shapes."""
    dims = [in_features, 512, 256, 128, num_classes]
    params = {}
    for layer in range(1, 5):
        fan_in, fan_out = dims[layer - 1], dims[layer]
        key, kw, kb = jax.random.split(key, 3)
        bound = 1.0 / jnp.sqrt(jnp.float32(fan_in))
        # stored as (in, out) so the kernel computes x @ W  (== PyTorch x @ W.T)
        params[f"w{layer}"] = jax.random.uniform(
            kw, (fan_in, fan_out), jnp.float32, -bound, bound)
        params[f"b{layer}"] = jax.random.uniform(
            kb, (1, fan_out), jnp.float32, -bound, bound)
        if layer < 4:
            # BatchNorm1d defaults: gamma=1, beta=0, running_mean=0, running_var=1
            params[f"g{layer}"] = jnp.ones((1, fan_out), jnp.float32)
            params[f"be{layer}"] = jnp.zeros((1, fan_out), jnp.float32)
            params[f"m{layer}"] = jnp.zeros((1, fan_out), jnp.float32)
            params[f"v{layer}"] = jnp.ones((1, fan_out), jnp.float32)
    return params


def top_layer_reference(x, params):
    """Pure-JAX f32 reference (module semantics in eval mode)."""
    h = x
    for layer in (1, 2, 3):
        h = h @ params[f"w{layer}"] + params[f"b{layer}"]
        h = (h - params[f"m{layer}"]) * jax.lax.rsqrt(
            params[f"v{layer}"] + BN_EPS) * params[f"g{layer}"] + params[f"be{layer}"]
        h = h * jax.nn.sigmoid(h)
    return h @ params["w4"] + params["b4"]


def top_layer_reference_matched(x, params, *, use_bf16=True, elementwise_bf16=True):
    """Reference mirroring the kernel's numerics (BN folded, bf16 matmul inputs,
    f32 accumulate, elementwise dtype, tanh-form SiLU)."""
    mm = jnp.bfloat16 if use_bf16 else jnp.float32
    ew = jnp.bfloat16 if (use_bf16 and elementwise_bf16) else jnp.float32
    h = x.astype(mm)
    for layer in (1, 2, 3):
        scale = params[f"g{layer}"] * jax.lax.rsqrt(params[f"v{layer}"] + BN_EPS)
        w = (params[f"w{layer}"] * scale).astype(mm)
        b = ((params[f"b{layer}"] - params[f"m{layer}"]) * scale
             + params[f"be{layer}"]).astype(ew)
        acc = jnp.dot(h, w, preferred_element_type=jnp.float32)
        h = _silu(acc.astype(ew) + b).astype(mm)
    return jnp.dot(h, params["w4"].astype(mm),
                   preferred_element_type=jnp.float32) + params["b4"]


# ---------------------------------- demo ----------------------------------- #

if __name__ == "__main__":
    in_features = 32
    num_classes = 10
    batch = 8

    key = jax.random.PRNGKey(0)
    key, kx = jax.random.split(key)
    x = jax.random.normal(kx, (batch, in_features), jnp.float32)
    params = init_params(key, in_features, num_classes)

    # Same chip-detection the factory uses (bf16 elementwise off on v5e).
    kind = jax.devices()[0].device_kind.lower()
    ew_bf16 = "v5" not in kind

    top_layer = make_top_layer(params, use_bf16=True, elementwise_bf16=ew_bf16)
    out = jax.block_until_ready(top_layer(x))
    assert out.shape == (batch, num_classes)

    # Tight check against a reference with matching numerics.
    ref_matched = top_layer_reference_matched(
        x, params, use_bf16=True, elementwise_bf16=ew_bf16)
    assert jnp.allclose(out, ref_matched, atol=2e-2, rtol=2e-2), \
        "mismatch vs numerics-matched reference"

    # Loose sanity check against the pure-f32 module semantics.
    ref_f32 = top_layer_reference(x, params)
    assert jnp.allclose(out, ref_f32, atol=7e-2, rtol=7e-2), \
        "mismatch vs f32 reference"

    print("KERNEL_OK")
</pallas_src>

<mosaic_0001>
module attributes {stable_mosaic.version = 11 : i64} {
  func.func @top_layer_kernel(%arg0: i32, %arg1: memref<16x32xf32, #tpu.memory_space<vmem>>, %arg2: memref<32x512xbf16, #tpu.memory_space<vmem>>, %arg3: memref<1x512xbf16, #tpu.memory_space<vmem>>, %arg4: memref<512x256xbf16, #tpu.memory_space<vmem>>, %arg5: memref<1x256xbf16, #tpu.memory_space<vmem>>, %arg6: memref<256x128xbf16, #tpu.memory_space<vmem>>, %arg7: memref<1x128xbf16, #tpu.memory_space<vmem>>, %arg8: memref<128x128xbf16, #tpu.memory_space<vmem>>, %arg9: memref<1x128xf32, #tpu.memory_space<vmem>>, %arg10: memref<16x128xf32, #tpu.memory_space<vmem>>) attributes {dimension_semantics = [#tpu.dimension_semantics<parallel>], iteration_bounds = array<i64: 1>, scalar_prefetch = 0 : i64, scratch_operands = 0 : i64, tpu.core_type = #tpu.core_type<tc>, window_params = [{transform_indices = @transform_0, window_bounds = array<i64: 16, 32>}, {pipeline_mode = #tpu.pipeline_mode<synchronous>, transform_indices = @transform_1, window_bounds = array<i64: 32, 512>}, {pipeline_mode = #tpu.pipeline_mode<synchronous>, transform_indices = @transform_2, window_bounds = array<i64: 1, 512>}, {pipeline_mode = #tpu.pipeline_mode<synchronous>, transform_indices = @transform_3, window_bounds = array<i64: 512, 256>}, {pipeline_mode = #tpu.pipeline_mode<synchronous>, transform_indices = @transform_4, window_bounds = array<i64: 1, 256>}, {pipeline_mode = #tpu.pipeline_mode<synchronous>, transform_indices = @transform_5, window_bounds = array<i64: 256, 128>}, {pipeline_mode = #tpu.pipeline_mode<synchronous>, transform_indices = @transform_6, window_bounds = array<i64: 1, 128>}, {pipeline_mode = #tpu.pipeline_mode<synchronous>, transform_indices = @transform_7, window_bounds = array<i64: 128, 128>}, {pipeline_mode = #tpu.pipeline_mode<synchronous>, transform_indices = @transform_8, window_bounds = array<i64: 1, 128>}, {transform_indices = @transform_9, window_bounds = array<i64: 16, 128>}]} {
    %c0 = arith.constant 0 : index
    %c0_0 = arith.constant 0 : index
    %0 = vector.load %arg1[%c0, %c0_0] : memref<16x32xf32, #tpu.memory_space<vmem>>, vector<16x32xf32>
    %1 = arith.truncf %0 : vector<16x32xf32> to vector<16x32xbf16>
    %c0_1 = arith.constant 0 : index
    %c0_2 = arith.constant 0 : index
    %2 = vector.load %arg2[%c0_1, %c0_2] : memref<32x512xbf16, #tpu.memory_space<vmem>>, vector<32x512xbf16>
    %cst = arith.constant dense<0.000000e+00> : vector<16x512xf32>
    %3 = tpu.matmul %1, %2, %cst {dimension_numbers = #tpu.dot_dimension_numbers<[1], [0], [0], [1], [0, 0, 1, 1], [], []>} : vector<16x32xbf16>, vector<32x512xbf16>, vector<16x512xf32> -> vector<16x512xf32>
    %4 = arith.truncf %3 : vector<16x512xf32> to vector<16x512xbf16>
    %c0_3 = arith.constant 0 : index
    %c0_4 = arith.constant 0 : index
    %5 = vector.load %arg3[%c0_3, %c0_4] : memref<1x512xbf16, #tpu.memory_space<vmem>>, vector<1x512xbf16>
    %6 = vector.broadcast %5 : vector<1x512xbf16> to vector<16x512xbf16>
    %7 = arith.addf %4, %6 : vector<16x512xbf16>
    %cst_5 = arith.constant 5.000000e-01 : bf16
    %8 = vector.broadcast %cst_5 : bf16 to vector<16x512xbf16>
    %9 = arith.mulf %8, %7 : vector<16x512xbf16>
    %10 = math.tanh %9 : vector<16x512xbf16>
    %cst_6 = arith.constant 1.000000e+00 : bf16
    %11 = vector.broadcast %cst_6 : bf16 to vector<16x512xbf16>
    %12 = arith.addf %10, %11 : vector<16x512xbf16>
    %13 = arith.mulf %9, %12 : vector<16x512xbf16>
    %c0_7 = arith.constant 0 : index
    %c0_8 = arith.constant 0 : index
    %14 = vector.load %arg4[%c0_7, %c0_8] : memref<512x256xbf16, #tpu.memory_space<vmem>>, vector<512x256xbf16>
    %cst_9 = arith.constant dense<0.000000e+00> : vector<16x256xf32>
    %15 = tpu.matmul %13, %14, %cst_9 {dimension_numbers = #tpu.dot_dimension_numbers<[1], [0], [0], [1], [0, 0, 1, 1], [], []>} : vector<16x512xbf16>, vector<512x256xbf16>, vector<16x256xf32> -> vector<16x256xf32>
    %16 = arith.truncf %15 : vector<16x256xf32> to vector<16x256xbf16>
    %c0_10 = arith.constant 0 : index
    %c0_11 = arith.constant 0 : index
    %17 = vector.load %arg5[%c0_10, %c0_11] : memref<1x256xbf16, #tpu.memory_space<vmem>>, vector<1x256xbf16>
    %18 = vector.broadcast %17 : vector<1x256xbf16> to vector<16x256xbf16>
    %19 = arith.addf %16, %18 : vector<16x256xbf16>
    %cst_12 = arith.constant 5.000000e-01 : bf16
    %20 = vector.broadcast %cst_12 : bf16 to vector<16x256xbf16>
    %21 = arith.mulf %20, %19 : vector<16x256xbf16>
    %22 = math.tanh %21 : vector<16x256xbf16>
    %cst_13 = arith.constant 1.000000e+00 : bf16
    %23 = vector.broadcast %cst_13 : bf16 to vector<16x256xbf16>
    %24 = arith.addf %22, %23 : vector<16x256xbf16>
    %25 = arith.mulf %21, %24 : vector<16x256xbf16>
    %c0_14 = arith.constant 0 : index
    %c0_15 = arith.constant 0 : index
    %26 = vector.load %arg6[%c0_14, %c0_15] : memref<256x128xbf16, #tpu.memory_space<vmem>>, vector<256x128xbf16>
    %cst_16 = arith.constant dense<0.000000e+00> : vector<16x128xf32>
    %27 = tpu.matmul %25, %26, %cst_16 {dimension_numbers = #tpu.dot_dimension_numbers<[1], [0], [0], [1], [0, 0, 1, 1], [], []>} : vector<16x256xbf16>, vector<256x128xbf16>, vector<16x128xf32> -> vector<16x128xf32>
    %28 = arith.truncf %27 : vector<16x128xf32> to vector<16x128xbf16>
    %c0_17 = arith.constant 0 : index
    %c0_18 = arith.constant 0 : index
    %29 = vector.load %arg7[%c0_17, %c0_18] : memref<1x128xbf16, #tpu.memory_space<vmem>>, vector<1x128xbf16>
    %30 = vector.broadcast %29 : vector<1x128xbf16> to vector<16x128xbf16>
    %31 = arith.addf %28, %30 : vector<16x128xbf16>
    %cst_19 = arith.constant 5.000000e-01 : bf16
    %32 = vector.broadcast %cst_19 : bf16 to vector<16x128xbf16>
    %33 = arith.mulf %32, %31 : vector<16x128xbf16>
    %34 = math.tanh %33 : vector<16x128xbf16>
    %cst_20 = arith.constant 1.000000e+00 : bf16
    %35 = vector.broadcast %cst_20 : bf16 to vector<16x128xbf16>
    %36 = arith.addf %34, %35 : vector<16x128xbf16>
    %37 = arith.mulf %33, %36 : vector<16x128xbf16>
    %c0_21 = arith.constant 0 : index
    %c0_22 = arith.constant 0 : index
    %38 = vector.load %arg8[%c0_21, %c0_22] : memref<128x128xbf16, #tpu.memory_space<vmem>>, vector<128x128xbf16>
    %cst_23 = arith.constant dense<0.000000e+00> : vector<16x128xf32>
    %39 = tpu.matmul %37, %38, %cst_23 {dimension_numbers = #tpu.dot_dimension_numbers<[1], [0], [0], [1], [0, 0, 1, 1], [], []>} : vector<16x128xbf16>, vector<128x128xbf16>, vector<16x128xf32> -> vector<16x128xf32>
    %c0_24 = arith.constant 0 : index
    %c0_25 = arith.constant 0 : index
    %40 = vector.load %arg9[%c0_24, %c0_25] : memref<1x128xf32, #tpu.memory_space<vmem>>, vector<1x128xf32>
    %41 = vector.broadcast %40 : vector<1x128xf32> to vector<16x128xf32>
    %42 = arith.addf %39, %41 : vector<16x128xf32>
    %c0_26 = arith.constant 0 : index
    %c0_27 = arith.constant 0 : index
    %43 = vector.load %arg10[%c0_26, %c0_27] : memref<16x128xf32, #tpu.memory_space<vmem>>, vector<16x128xf32>
    tpu.vector_store %arg10[%c0_26, %c0_27], %42 {strides = array<i32>} : memref<16x128xf32, #tpu.memory_space<vmem>>, vector<16x128xf32>,
    return
  }
  func.func @transform_0(%arg0: i32) -> (i32, i32) {
    %c0_i32 = arith.constant 0 : i32
    %c0_i32_0 = arith.constant 0 : i32
    return %arg0, %c0_i32 : i32, i32
  }
  func.func @transform_1(%arg0: i32) -> (i32, i32) {
    %c0_i32 = arith.constant 0 : i32
    %c0_i32_0 = arith.constant 0 : i32
    %c0_i32_1 = arith.constant 0 : i32
    return %c0_i32, %c0_i32_0 : i32, i32
  }
  func.func @transform_2(%arg0: i32) -> (i32, i32) {
    %c0_i32 = arith.constant 0 : i32
    %c0_i32_0 = arith.constant 0 : i32
    %c0_i32_1 = arith.constant 0 : i32
    return %c0_i32, %c0_i32_0 : i32, i32
  }
  func.func @transform_3(%arg0: i32) -> (i32, i32) {
    %c0_i32 = arith.constant 0 : i32
    %c0_i32_0 = arith.constant 0 : i32
    %c0_i32_1 = arith.constant 0 : i32
    return %c0_i32, %c0_i32_0 : i32, i32
  }
  func.func @transform_4(%arg0: i32) -> (i32, i32) {
    %c0_i32 = arith.constant 0 : i32
    %c0_i32_0 = arith.constant 0 : i32
    %c0_i32_1 = arith.constant 0 : i32
    return %c0_i32, %c0_i32_0 : i32, i32
  }
  func.func @transform_5(%arg0: i32) -> (i32, i32) {
    %c0_i32 = arith.constant 0 : i32
    %c0_i32_0 = arith.constant 0 : i32
    %c0_i32_1 = arith.constant 0 : i32
    return %c0_i32, %c0_i32_0 : i32, i32
  }
  func.func @transform_6(%arg0: i32) -> (i32, i32) {
    %c0_i32 = arith.constant 0 : i32
    %c0_i32_0 = arith.constant 0 : i32
    %c0_i32_1 = arith.constant 0 : i32
    return %c0_i32, %c0_i32_0 : i32, i32
  }
  func.func @transform_7(%arg0: i32) -> (i32, i32) {
    %c0_i32 = arith.constant 0 : i32
    %c0_i32_0 = arith.constant 0 : i32
    %c0_i32_1 = arith.constant 0 : i32
    return %c0_i32, %c0_i32_0 : i32, i32
  }
  func.func @transform_8(%arg0: i32) -> (i32, i32) {
    %c0_i32 = arith.constant 0 : i32
    %c0_i32_0 = arith.constant 0 : i32
    %c0_i32_1 = arith.constant 0 : i32
    return %c0_i32, %c0_i32_0 : i32, i32
  }
  func.func @transform_9(%arg0: i32) -> (i32, i32) {
    %c0_i32 = arith.constant 0 : i32
    %c0_i32_0 = arith.constant 0 : i32
    return %arg0, %c0_i32 : i32, i32
  }
}

</mosaic_0001>

<llo_original>
// kernel: forward.1
$region0: #{forward.1}
  #allocation0 [shape = 'u32[]', space=smem, size = 0x4, offset = 0x4, fixed_abs, tag = 'smem constant byte address 0x4 - core index']
  #allocation1 [shape = 'u32[144,128]{1,0:T(1,128)}', space=vmem, size = 0x12000, scoped, tag = 'internal scratch']
  %s0 = inlined_call_operand.hbm [shape: f32[8,32], index: 0, kind: input, shape index: {}]
  %s1 = inlined_call_operand.hbm [shape: bf16[32,512], index: 1, kind: input, shape index: {}]
  %s2 = inlined_call_operand.vmem [shape: bf16[1,512], index: 2, kind: input, shape index: {}]
  %s3 = inlined_call_operand.hbm [shape: bf16[512,256], index: 3, kind: input, shape index: {}]
  %s4 = inlined_call_operand.vmem [shape: bf16[1,256], index: 4, kind: input, shape index: {}]
  %s5 = inlined_call_operand.hbm [shape: bf16[256,128], index: 5, kind: input, shape index: {}]
  %s6 = inlined_call_operand.vmem [shape: bf16[1,128], index: 6, kind: input, shape index: {}]
  %s7 = inlined_call_operand.hbm [shape: bf16[128,128], index: 7, kind: input, shape index: {}]
  %s8 = inlined_call_operand.vmem [shape: f32[1,128], index: 8, kind: input, shape index: {}]
  %s9 = inlined_call_operand.hbm [shape: f32[8,128], index: 9, kind: output, shape index: {}]
  %s10 = sld [smem:[#allocation0]]
  $region66: #{forward.1} parent=0
    _
  %s12 = ssub.s32 1, %s10
  %s13 = scalar_select 0, %s12, %s10
  $region1: #{forward.1} parent=0
    #allocation2 [shape = 'u8[8192]{0}', space=vmem, size = 0x2000, scoped, tag = 'input window, operand 0, single buffered']
    #allocation3 [shape = 's32[1]{0}', space=sflag, size = 0x4, scoped, tag = 'scoped memory for forward.1']
    #allocation4 [shape = 's32[1]{0}', space=sflag, size = 0x4, scoped, tag = 'scoped memory for forward.1']
    #allocation5 [shape = 'u8[32768]{0}', space=vmem, size = 0x8000, scoped, tag = 'input window, operand 1, single buffered']
    #allocation6 [shape = 's32[1]{0}', space=sflag, size = 0x4, scoped, tag = 'scoped memory for forward.1']
    #allocation7 [shape = 'u8[262144]{0}', space=vmem, size = 0x40000, scoped, tag = 'input window, operand 3, single buffered']
    #allocation8 [shape = 'u8[65536]{0}', space=vmem, size = 0x10000, scoped, tag = 'input window, operand 5, single buffered']
    #allocation9 [shape = 's32[1]{0}', space=sflag, size = 0x4, scoped, tag = 'scoped memory for forward.1']
    #allocation10 [shape = 'u8[32768]{0}', space=vmem, size = 0x8000, scoped, tag = 'input window, operand 7, single buffered']
    #allocation11 [shape = 'u8[8192]{0}', space=vmem, size = 0x2000, scoped, tag = 'output window, operand 0, single buffered']
    %14 = vsyncpa [#allocation3], 0
    %15 = vsyncpa [#allocation6], 0
    %16 = vsyncpa [#allocation9], 0
    %17 = vsyncpa [#allocation4], 0
    // Predicated region
    $region2: #{forward.1} parent=1 // pred_check
      _
    $region3: #{forward.1} parent=1 // pred_check_branch
      %19 = sbr.rel (0) target = $region5
    $region4: #{forward.1} parent=1 // pred_region
      %s21 = ssub.s32 256, 128
      %22 = vsyncadd [#allocation3], %s21
      %s23 = sshll.u32 [#allocation2], 4
      %s24 = int_to_ptr.vmem [resolvable:$true] %s23
      %29 = dma.hbm_to_vmem [thread:$0]  %s0, 128, %s24, [#allocation3], 128, 128, 8
    $region5: #{forward.1} parent=1 // pred_fallthru
      _
    // Predicated region
    $region6: #{forward.1} parent=1 // pred_check
      _
    $region7: #{forward.1} parent=1 // pred_check_branch
      %31 = sbr.rel (0) target = $region9
    $region8: #{forward.1} parent=1 // pred_region
      %s33 = ssub.s32 1024, 1024
      %34 = vsyncadd [#allocation6], %s33
      %s35 = sshll.u32 [#allocation5], 4
      %s36 = int_to_ptr.vmem [resolvable:$true] %s35
      %41 = dma.hbm_to_vmem [thread:$0]  %s1, 1024, %s36, [#allocation6], 256, 256, 16
    $region9: #{forward.1} parent=1 // pred_fallthru
      _
    // Predicated region
    $region10: #{forward.1} parent=1 // pred_check
      _
    $region11: #{forward.1} parent=1 // pred_check_branch
      %43 = sbr.rel (0) target = $region13
    $region12: #{forward.1} parent=1 // pred_region
      _
    $region13: #{forward.1} parent=1 // pred_fallthru
      _
    // Predicated region
    $region14: #{forward.1} parent=1 // pred_check
      _
    $region15: #{forward.1} parent=1 // pred_check_branch
      %45 = sbr.rel (0) target = $region17
    $region16: #{forward.1} parent=1 // pred_region
      %s47 = ssub.s32 8192, 8192
      %48 = vsyncadd [#allocation6], %s47
      %s49 = sshll.u32 [#allocation7], 4
      %s50 = int_to_ptr.vmem [resolvable:$true] %s49
      %55 = dma.hbm_to_vmem [thread:$0]  %s3, 8192, %s50, [#allocation6], 128, 128, 8
    $region17: #{forward.1} parent=1 // pred_fallthru
      _
    // Predicated region
    $region18: #{forward.1} parent=1 // pred_check
      _
    $region19: #{forward.1} parent=1 // pred_check_branch
      %57 = sbr.rel (0) target = $region21
    $region20: #{forward.1} parent=1 // pred_region
      _
    $region21: #{forward.1} parent=1 // pred_fallthru
      _
    // Predicated region
    $region22: #{forward.1} parent=1 // pred_check
      _
    $region23: #{forward.1} parent=1 // pred_check_branch
      %59 = sbr.rel (0) target = $region25
    $region24: #{forward.1} parent=1 // pred_region
      %s61 = ssub.s32 2048, 2048
      %62 = vsyncadd [#allocation9], %s61
      %s63 = sshll.u32 [#allocation8], 4
      %s64 = int_to_ptr.vmem [resolvable:$true] %s63
      %69 = dma.hbm_to_vmem [thread:$0]  %s5, 2048, %s64, [#allocation9], 64, 64, 4
    $region25: #{forward.1} parent=1 // pred_fallthru
      _
    // Predicated region
    $region26: #{forward.1} parent=1 // pred_check
      _
    $region27: #{forward.1} parent=1 // pred_check_branch
      %71 = sbr.rel (0) target = $region29
    $region28: #{forward.1} parent=1 // pred_region
      _
    $region29: #{forward.1} parent=1 // pred_fallthru
      _
    // Predicated region
    $region30: #{forward.1} parent=1 // pred_check
      _
    $region31: #{forward.1} parent=1 // pred_check_branch
      %73 = sbr.rel (0) target = $region33
    $region32: #{forward.1} parent=1 // pred_region
      %s75 = ssub.s32 1024, 1024
      %76 = vsyncadd [#allocation9], %s75
      %s77 = sshll.u32 [#allocation10], 4
      %s78 = int_to_ptr.vmem [resolvable:$true] %s77
      %83 = dma.hbm_to_vmem [thread:$0]  %s7, 1024, %s78, [#allocation9], 64, 64, 4
    $region33: #{forward.1} parent=1 // pred_fallthru
      _
    // Predicated region
    $region34: #{forward.1} parent=1 // pred_check
      _
    $region35: #{forward.1} parent=1 // pred_check_branch
      %85 = sbr.rel (0) target = $region37
    $region36: #{forward.1} parent=1 // pred_region
      _
    $region37: #{forward.1} parent=1 // pred_fallthru
      _
    // Predicated region
    $region38: #{forward.1} parent=1 // pred_check
      _
    $region39: #{forward.1} parent=1 // pred_check_branch
      %87 = sbr.rel (0) target = $region41
    $region40: #{forward.1} parent=1 // pred_region
      %88 = dma.done [#allocation3], 256
    $region41: #{forward.1} parent=1 // pred_fallthru
      _
    // Predicated region
    $region42: #{forward.1} parent=1 // pred_check
      _
    $region43: #{forward.1} parent=1 // pred_check_branch
      %90 = sbr.rel (0) target = $region45
    $region44: #{forward.1} parent=1 // pred_region
      %91 = dma.done [#allocation6], 1024
    $region45: #{forward.1} parent=1 // pred_fallthru
      _
    // Predicated region
    $region46: #{forward.1} parent=1 // pred_check
      _
    $region47: #{forward.1} parent=1 // pred_check_branch
      %93 = sbr.rel (0) target = $region49
    $region48: #{forward.1} parent=1 // pred_region
      %94 = dma.done [#allocation6], 8192
    $region49: #{forward.1} parent=1 // pred_fallthru
      _
    // Predicated region
    $region50: #{forward.1} parent=1 // pred_check
      _
    $region51: #{forward.1} parent=1 // pred_check_branch
      %96 = sbr.rel (0) target = $region53
    $region52: #{forward.1} parent=1 // pred_region
      %97 = dma.done [#allocation9], 2048
    $region53: #{forward.1} parent=1 // pred_fallthru
      _
    // Predicated region
    $region54: #{forward.1} parent=1 // pred_check
      _
    $region55: #{forward.1} parent=1 // pred_check_branch
      %99 = sbr.rel (0) target = $region57
    $region56: #{forward.1} parent=1 // pred_region
      %100 = dma.done [#allocation9], 1024
    $region57: #{forward.1} parent=1 // pred_fallthru
      _
    %v104 = vld [vmem:[#allocation2] sm:$0xff]
    %v105 = vld [vmem:[#allocation2 + $0x8] sm:$0xff]
    %v106 = vpack.c.bf16 %v105, %v104
    %v107 = vld [vmem:[#allocation5] sm:$0xff]
    %v108 = vld [vmem:[#allocation5 + $0x8] sm:$0xff]
    %v109 = vld [vmem:[#allocation5 + $0x10] sm:$0xff]
    %v110 = vld [vmem:[#allocation5 + $0x18] sm:$0xff]
    %v111 = vld [vmem:[#allocation5 + $0x20] sm:$0xff]
    %v112 = vld [vmem:[#allocation5 + $0x28] sm:$0xff]
    %v113 = vld [vmem:[#allocation5 + $0x30] sm:$0xff]
    %v114 = vld [vmem:[#allocation5 + $0x38] sm:$0xff]
    %v123 = vunpack.c.l.b16 %v107
    %v124 = vunpack.c.h.b16 %v107
    %v125 = vunpack.c.l.b16 %v108
    %v126 = vunpack.c.h.b16 %v108
    %v127 = vunpack.c.l.b16 %v109
    %v128 = vunpack.c.h.b16 %v109
    %v129 = vunpack.c.l.b16 %v110
    %v130 = vunpack.c.h.b16 %v110
    %v131 = vunpack.c.l.b16 %v111
    %v132 = vunpack.c.h.b16 %v111
    %v133 = vunpack.c.l.b16 %v112
    %v134 = vunpack.c.h.b16 %v112
    %v135 = vunpack.c.l.b16 %v113
    %v136 = vunpack.c.h.b16 %v113
    %v137 = vunpack.c.l.b16 %v114
    %v138 = vunpack.c.h.b16 %v114
    %v139 = vpack.c.b16 %v127, %v123
    %v140 = vpack.c.b16 %v128, %v124
    %v141 = vpack.c.b16 %v129, %v125
    %v142 = vpack.c.b16 %v130, %v126
    %v143 = vpack.c.b16 %v135, %v131
    %v144 = vpack.c.b16 %v136, %v132
    %v145 = vpack.c.b16 %v137, %v133
    %v146 = vpack.c.b16 %v138, %v134
    %vm155 = vcmask 261120
    %v157 = vsel %vm155, %v106, 0
    %159 = vmatprep.subr.bf16.mxu0 %v140
    %160 = vmatpush1.bf16.msra.mxu0 %v139
    %161 = vmatprep.subr.bf16.mxu0 %v144
    %162 = vmatpush1.bf16.msra.mxu0 %v143
    %163 = vmatprep.subr.bf16.mxu0 0
    %164 = vmatpush1.bf16.msra.mxu0 0
    %165 = vmatprep.subr.bf16.mxu0 0
    %166 = vmatpush1.bf16.msra.mxu0 0
    %167 = vmatprep.subr.bf16.mxu0 0
    %168 = vmatpush1.bf16.msra.mxu0 0
    %169 = vmatprep.subr.bf16.mxu0 0
    %170 = vmatpush1.bf16.msra.mxu0 0
    %171 = vmatprep.subr.bf16.mxu0 0
    %172 = vmatpush1.bf16.msra.mxu0 0
    %173 = vmatprep.subr.bf16.mxu0 0
    %174 = vmatpush1.bf16.msra.mxu0 0
    %175 = vmatprep.subr.bf16.mxu0 0
    %176 = vmatpush1.bf16.msra.mxu0 0
    %177 = vmatprep.subr.bf16.mxu0 0
    %178 = vmatpush1.bf16.msra.mxu0 0
    %179 = vmatprep.subr.bf16.mxu0 0
    %180 = vmatpush1.bf16.msra.mxu0 0
    %181 = vmatprep.subr.bf16.mxu0 0
    %182 = vmatpush1.bf16.msra.mxu0 0
    %183 = vmatprep.subr.bf16.mxu0 0
    %184 = vmatpush1.bf16.msra.mxu0 0
    %185 = vmatprep.subr.bf16.mxu0 0
    %186 = vmatpush1.bf16.msra.mxu0 0
    %187 = vmatprep.subr.bf16.mxu0 0
    %188 = vmatpush1.bf16.msra.mxu0 0
    %189 = vmatprep.subr.bf16.mxu0 0
    %190 = vmatpush1.bf16.msra.mxu0 0
    %191 = vmatprep.mubr.bf16.mxu0 0
    %192 = vmatmul.mubr.bf16.gmra.mrb[0].mxu0 %v157
    %v193 = vpop.f32.mrb[0].mxu0
    %v194 = vadd.f32 0.0, %v193
    %v195 = vpop.f32.mrb[0].mxu0
    %v196 = vadd.f32 0.0, %v195
    %v197 = vpop.f32.mrb[0].mxu0
    %v198 = vadd.f32 0.0, %v197
    %v199 = vpop.f32.mrb[0].mxu0
    %v200 = vadd.f32 0.0, %v199
    %201 = vdwg.mxu0
    %202 = vmatprep.subr.bf16.mxu0 %v142
    %203 = vmatpush1.bf16.msra.mxu0 %v141
    %204 = vmatprep.subr.bf16.mxu0 %v146
    %205 = vmatpush1.bf16.msra.mxu0 %v145
    %206 = vmatprep.subr.bf16.mxu0 0
    %207 = vmatpush1.bf16.msra.mxu0 0
    %208 = vmatprep.subr.bf16.mxu0 0
    %209 = vmatpush1.bf16.msra.mxu0 0
    %210 = vmatprep.subr.bf16.mxu0 0
    %211 = vmatpush1.bf16.msra.mxu0 0
    %212 = vmatprep.subr.bf16.mxu0 0
    %213 = vmatpush1.bf16.msra.mxu0 0
    %214 = vmatprep.subr.bf16.mxu0 0
    %215 = vmatpush1.bf16.msra.mxu0 0
    %216 = vmatprep.subr.bf16.mxu0 0
    %217 = vmatpush1.bf16.msra.mxu0 0
    %218 = vmatprep.subr.bf16.mxu0 0
    %219 = vmatpush1.bf16.msra.mxu0 0
    %220 = vmatprep.subr.bf16.mxu0 0
    %221 = vmatpush1.bf16.msra.mxu0 0
    %222 = vmatprep.subr.bf16.mxu0 0
    %223 = vmatpush1.bf16.msra.mxu0 0
    %224 = vmatprep.subr.bf16.mxu0 0
    %225 = vmatpush1.bf16.msra.mxu0 0
    %226 = vmatprep.subr.bf16.mxu0 0
    %227 = vmatpush1.bf16.msra.mxu0 0
    %228 = vmatprep.subr.bf16.mxu0 0
    %229 = vmatpush1.bf16.msra.mxu0 0
    %230 = vmatprep.subr.bf16.mxu0 0
    %231 = vmatpush1.bf16.msra.mxu0 0
    %232 = vmatprep.subr.bf16.mxu0 0
    %233 = vmatpush1.bf16.msra.mxu0 0
    %234 = vmatprep.mubr.bf16.mxu0 0
    %235 = vmatmul.mubr.bf16.gmra.mrb[0].mxu0 %v157
    %v236 = vpop.f32.mrb[0].mxu0
    %v237 = vadd.f32 0.0, %v236
    %v238 = vpop.f32.mrb[0].mxu0
    %v239 = vadd.f32 0.0, %v238
    %v240 = vpop.f32.mrb[0].mxu0
    %v241 = vadd.f32 0.0, %v240
    %v242 = vpop.f32.mrb[0].mxu0
    %v243 = vadd.f32 0.0, %v242
    %244 = vdwg.mxu0
    %v245 = vpack.c.bf16 %v198, %v194
    %v246 = vpack.c.bf16 %v200, %v196
    %v247 = vpack.c.bf16 %v241, %v237
    %v248 = vpack.c.bf16 %v243, %v239
    %v249 = vld [vmem:[%s2] sm:$0xf]
    %v252 = vunpack.c.l.s4 1966171168
    %v253 = vunpack.c.0.s8 %v252
    %v254 = vlaneseq
    %v255 = vshrl.u32 %v254, 7
    %v256 = vsub.s32 %v253, %v255
    %v257 = vrot.slane %v249, %v256
    %v258 = vcombine.high %v257, %v257
    %v260 = vunpack.c.l.s4 1966171168
    %v261 = vunpack.c.0.s8 %v260
    %v262 = vlaneseq
    %v263 = vshrl.u32 %v262, 7
    %v264 = vsub.s32 %v261, %v263
    %v265 = vrot.slane %v257, %v264
    %v267 = vunpack.c.l.s4 1966171168
    %v268 = vunpack.c.0.s8 %v267
    %v269 = vlaneseq
    %v270 = vshrl.u32 %v269, 7
    %v271 = vsub.s32 %v268, %v270
    %v272 = vrot.slane %v258, %v271
    %v273 = vcombine.high %v265, %v265
    %v274 = vcombine.high %v272, %v272
    %v276 = vpack.i.b16 %v265, %v265
    %v278 = vlaneseq
    %v279 = vshrl.u32 %v278, 7
    %v280 = vsub.s32 0, %v279
    %v281 = vrot.slane %v276, %v280
    %v283 = vpack.i.b16 %v272, %v272
    %v285 = vlaneseq
    %v286 = vshrl.u32 %v285, 7
    %v287 = vsub.s32 0, %v286
    %v288 = vrot.slane %v283, %v287
    %v290 = vpack.i.b16 %v273, %v273
    %v292 = vlaneseq
    %v293 = vshrl.u32 %v292, 7
    %v294 = vsub.s32 0, %v293
    %v295 = vrot.slane %v290, %v294
    %v297 = vpack.i.b16 %v274, %v274
    %v299 = vlaneseq
    %v300 = vshrl.u32 %v299, 7
    %v301 = vsub.s32 0, %v300
    %v302 = vrot.slane %v297, %v301
    %v303 = vadd.bf16 %v245, %v281
    %v304 = vadd.bf16 %v246, %v288
    %v305 = vadd.bf16 %v247, %v295
    %v306 = vadd.bf16 %v248, %v302
    %v307 = vmul.bf16 %v303, 1056980736
    %v308 = vmul.bf16 %v304, 1056980736
    %v309 = vmul.bf16 %v305, 1056980736
    %v310 = vmul.bf16 %v306, 1056980736
    %v311 = vtanh.bf16.pop %v307
    %v312 = vtanh.bf16.pop %v308
    %v313 = vtanh.bf16.pop %v309
    %v314 = vtanh.bf16.pop %v310
    %v315 = vadd.bf16 %v311, 1065369472
    %v316 = vadd.bf16 %v312, 1065369472
    %v317 = vadd.bf16 %v313, 1065369472
    %v318 = vadd.bf16 %v314, 1065369472
    %v319 = vmul.bf16 %v307, %v315
    %v320 = vmul.bf16 %v308, %v316
    %v321 = vmul.bf16 %v309, %v317
    %v322 = vmul.bf16 %v310, %v318
    %v323 = vld [vmem:[#allocation7] sm:$0xff]
    %v324 = vld [vmem:[#allocation7 + $0x8] sm:$0xff]
    %v325 = vld [vmem:[#allocation7 + $0x10] sm:$0xff]
    %v326 = vld [vmem:[#allocation7 + $0x18] sm:$0xff]
    %v327 = vld [vmem:[#allocation7 + $0x20] sm:$0xff]
    %v328 = vld [vmem:[#allocation7 + $0x28] sm:$0xff]
    %v329 = vld [vmem:[#allocation7 + $0x30] sm:$0xff]
    %v330 = vld [vmem:[#allocation7 + $0x38] sm:$0xff]
    %v331 = vld [vmem:[#allocation7 + $0x40] sm:$0xff]
    %v332 = vld [vmem:[#allocation7 + $0x48] sm:$0xff]
    %v333 = vld [vmem:[#allocation7 + $0x50] sm:$0xff]
    %v334 = vld [vmem:[#allocation7 + $0x58] sm:$0xff]
    %v335 = vld [vmem:[#allocation7 + $0x60] sm:$0xff]
    %v336 = vld [vmem:[#allocation7 + $0x68] sm:$0xff]
    %v337 = vld [vmem:[#allocation7 + $0x70] sm:$0xff]
    %v338 = vld [vmem:[#allocation7 + $0x78] sm:$0xff]
    %v339 = vld [vmem:[#allocation7 + $0x80] sm:$0xff]
    %v340 = vld [vmem:[#allocation7 + $0x88] sm:$0xff]
    %v341 = vld [vmem:[#allocation7 + $0x90] sm:$0xff]
    %v342 = vld [vmem:[#allocation7 + $0x98] sm:$0xff]
    %v343 = vld [vmem:[#allocation7 + $0xa0] sm:$0xff]
    %v344 = vld [vmem:[#allocation7 + $0xa8] sm:$0xff]
    %v345 = vld [vmem:[#allocation7 + $0xb0] sm:$0xff]
    %v346 = vld [vmem:[#allocation7 + $0xb8] sm:$0xff]
    %v347 = vld [vmem:[#allocation7 + $0xc0] sm:$0xff]
    %v348 = vld [vmem:[#allocation7 + $0xc8] sm:$0xff]
    %v349 = vld [vmem:[#allocation7 + $0xd0] sm:$0xff]
    %v350 = vld [vmem:[#allocation7 + $0xd8] sm:$0xff]
    %v351 = vld [vmem:[#allocation7 + $0xe0] sm:$0xff]
    %v352 = vld [vmem:[#allocation7 + $0xe8] sm:$0xff]
    %v353 = vld [vmem:[#allocation7 + $0xf0] sm:$0xff]
    %v354 = vld [vmem:[#allocation7 + $0xf8] sm:$0xff]
    %v355 = vld [vmem:[#allocation7 + $0x100] sm:$0xff]
    %v356 = vld [vmem:[#allocation7 + $0x108] sm:$0xff]
    %v357 = vld [vmem:[#allocation7 + $0x110] sm:$0xff]
    %v358 = vld [vmem:[#allocation7 + $0x118] sm:$0xff]
    %v359 = vld [vmem:[#allocation7 + $0x120] sm:$0xff]
    %v360 = vld [vmem:[#allocation7 + $0x128] sm:$0xff]
    %v361 = vld [vmem:[#allocation7 + $0x130] sm:$0xff]
    %v362 = vld [vmem:[#allocation7 + $0x138] sm:$0xff]
    %v363 = vld [vmem:[#allocation7 + $0x140] sm:$0xff]
    %v364 = vld [vmem:[#allocation7 + $0x148] sm:$0xff]
    %v365 = vld [vmem:[#allocation7 + $0x150] sm:$0xff]
    %v366 = vld [vmem:[#allocation7 + $0x158] sm:$0xff]
    %v367 = vld [vmem:[#allocation7 + $0x160] sm:$0xff]
    %v368 = vld [vmem:[#allocation7 + $0x168] sm:$0xff]
    %v369 = vld [vmem:[#allocation7 + $0x170] sm:$0xff]
    %v370 = vld [vmem:[#allocation7 + $0x178] sm:$0xff]
    %v371 = vld [vmem:[#allocation7 + $0x180] sm:$0xff]
    %v372 = vld [vmem:[#allocation7 + $0x188] sm:$0xff]
    %v373 = vld [vmem:[#allocation7 + $0x190] sm:$0xff]
    %v374 = vld [vmem:[#allocation7 + $0x198] sm:$0xff]
    %v375 = vld [vmem:[#allocation7 + $0x1a0] sm:$0xff]
    %v376 = vld [vmem:[#allocation7 + $0x1a8] sm:$0xff]
    %v377 = vld [vmem:[#allocation7 + $0x1b0] sm:$0xff]
    %v378 = vld [vmem:[#allocation7 + $0x1b8] sm:$0xff]
    %v379 = vld [vmem:[#allocation7 + $0x1c0] sm:$0xff]
    %v380 = vld [vmem:[#allocation7 + $0x1c8] sm:$0xff]
    %v381 = vld [vmem:[#allocation7 + $0x1d0] sm:$0xff]
    %v382 = vld [vmem:[#allocation7 + $0x1d8] sm:$0xff]
    %v383 = vld [vmem:[#allocation7 + $0x1e0] sm:$0xff]
    %v384 = vld [vmem:[#allocation7 + $0x1e8] sm:$0xff]
    %v385 = vld [vmem:[#allocation7 + $0x1f0] sm:$0xff]
    %v386 = vld [vmem:[#allocation7 + $0x1f8] sm:$0xff]
    %v451 = vunpack.c.l.b16 %v323
    %v452 = vunpack.c.h.b16 %v323
    %v453 = vunpack.c.l.b16 %v324
    %v454 = vunpack.c.h.b16 %v324
    %v455 = vunpack.c.l.b16 %v325
    %v456 = vunpack.c.h.b16 %v325
    %v457 = vunpack.c.l.b16 %v326
    %v458 = vunpack.c.h.b16 %v326
    %v459 = vunpack.c.l.b16 %v327
    %v460 = vunpack.c.h.b16 %v327
    %v461 = vunpack.c.l.b16 %v328
    %v462 = vunpack.c.h.b16 %v328
    %v463 = vunpack.c.l.b16 %v329
    %v464 = vunpack.c.h.b16 %v329
    %v465 = vunpack.c.l.b16 %v330
    %v466 = vunpack.c.h.b16 %v330
    %v467 = vunpack.c.l.b16 %v331
    %v468 = vunpack.c.h.b16 %v331
    %v469 = vunpack.c.l.b16 %v332
    %v470 = vunpack.c.h.b16 %v332
    %v471 = vunpack.c.l.b16 %v333
    %v472 = vunpack.c.h.b16 %v333
    %v473 = vunpack.c.l.b16 %v334
    %v474 = vunpack.c.h.b16 %v334
    %v475 = vunpack.c.l.b16 %v335
    %v476 = vunpack.c.h.b16 %v335
    %v477 = vunpack.c.l.b16 %v336
    %v478 = vunpack.c.h.b16 %v336
    %v479 = vunpack.c.l.b16 %v337
    %v480 = vunpack.c.h.b16 %v337
    %v481 = vunpack.c.l.b16 %v338
    %v482 = vunpack.c.h.b16 %v338
    %v483 = vunpack.c.l.b16 %v339
    %v484 = vunpack.c.h.b16 %v339
    %v485 = vunpack.c.l.b16 %v340
    %v486 = vunpack.c.h.b16 %v340
    %v487 = vunpack.c.l.b16 %v341
    %v488 = vunpack.c.h.b16 %v341
    %v489 = vunpack.c.l.b16 %v342
    %v490 = vunpack.c.h.b16 %v342
    %v491 = vunpack.c.l.b16 %v343
    %v492 = vunpack.c.h.b16 %v343
    %v493 = vunpack.c.l.b16 %v344
    %v494 = vunpack.c.h.b16 %v344
    %v495 = vunpack.c.l.b16 %v345
    %v496 = vunpack.c.h.b16 %v345
    %v497 = vunpack.c.l.b16 %v346
    %v498 = vunpack.c.h.b16 %v346
    %v499 = vunpack.c.l.b16 %v347
    %v500 = vunpack.c.h.b16 %v347
    %v501 = vunpack.c.l.b16 %v348
    %v502 = vunpack.c.h.b16 %v348
    %v503 = vunpack.c.l.b16 %v349
    %v504 = vunpack.c.h.b16 %v349
    %v505 = vunpack.c.l.b16 %v350
    %v506 = vunpack.c.h.b16 %v350
    %v507 = vunpack.c.l.b16 %v351
    %v508 = vunpack.c.h.b16 %v351
    %v509 = vunpack.c.l.b16 %v352
    %v510 = vunpack.c.h.b16 %v352
    %v511 = vunpack.c.l.b16 %v353
    %v512 = vunpack.c.h.b16 %v353
    %v513 = vunpack.c.l.b16 %v354
    %v514 = vunpack.c.h.b16 %v354
    %v515 = vunpack.c.l.b16 %v355
    %v516 = vunpack.c.h.b16 %v355
    %v517 = vunpack.c.l.b16 %v356
    %v518 = vunpack.c.h.b16 %v356
    %v519 = vunpack.c.l.b16 %v357
    %v520 = vunpack.c.h.b16 %v357
    %v521 = vunpack.c.l.b16 %v358
    %v522 = vunpack.c.h.b16 %v358
    %v523 = vunpack.c.l.b16 %v359
    %v524 = vunpack.c.h.b16 %v359
    %v525 = vunpack.c.l.b16 %v360
    %v526 = vunpack.c.h.b16 %v360
    %v527 = vunpack.c.l.b16 %v361
    %v528 = vunpack.c.h.b16 %v361
    %v529 = vunpack.c.l.b16 %v362
    %v530 = vunpack.c.h.b16 %v362
    %v531 = vunpack.c.l.b16 %v363
    %v532 = vunpack.c.h.b16 %v363
    %v533 = vunpack.c.l.b16 %v364
    %v534 = vunpack.c.h.b16 %v364
    %v535 = vunpack.c.l.b16 %v365
    %v536 = vunpack.c.h.b16 %v365
    %v537 = vunpack.c.l.b16 %v366
    %v538 = vunpack.c.h.b16 %v366
    %v539 = vunpack.c.l.b16 %v367
    %v540 = vunpack.c.h.b16 %v367
    %v541 = vunpack.c.l.b16 %v368
    %v542 = vunpack.c.h.b16 %v368
    %v543 = vunpack.c.l.b16 %v369
    %v544 = vunpack.c.h.b16 %v369
    %v545 = vunpack.c.l.b16 %v370
    %v546 = vunpack.c.h.b16 %v370
    %v547 = vunpack.c.l.b16 %v371
    %v548 = vunpack.c.h.b16 %v371
    %v549 = vunpack.c.l.b16 %v372
    %v550 = vunpack.c.h.b16 %v372
    %v551 = vunpack.c.l.b16 %v373
    %v552 = vunpack.c.h.b16 %v373
    %v553 = vunpack.c.l.b16 %v374
    %v554 = vunpack.c.h.b16 %v374
    %v555 = vunpack.c.l.b16 %v375
    %v556 = vunpack.c.h.b16 %v375
    %v557 = vunpack.c.l.b16 %v376
    %v558 = vunpack.c.h.b16 %v376
    %v559 = vunpack.c.l.b16 %v377
    %v560 = vunpack.c.h.b16 %v377
    %v561 = vunpack.c.l.b16 %v378
    %v562 = vunpack.c.h.b16 %v378
    %v563 = vunpack.c.l.b16 %v379
    %v564 = vunpack.c.h.b16 %v379
    %v565 = vunpack.c.l.b16 %v380
    %v566 = vunpack.c.h.b16 %v380
    %v567 = vunpack.c.l.b16 %v381
    %v568 = vunpack.c.h.b16 %v381
    %v569 = vunpack.c.l.b16 %v382
    %v570 = vunpack.c.h.b16 %v382
    %v571 = vunpack.c.l.b16 %v383
    %v572 = vunpack.c.h.b16 %v383
    %v573 = vunpack.c.l.b16 %v384
    %v574 = vunpack.c.h.b16 %v384
    %v575 = vunpack.c.l.b16 %v385
    %v576 = vunpack.c.h.b16 %v385
    %v577 = vunpack.c.l.b16 %v386
    %v578 = vunpack.c.h.b16 %v386
    %v579 = vpack.c.b16 %v453, %v451
    %v580 = vpack.c.b16 %v454, %v452
    %v581 = vpack.c.b16 %v457, %v455
    %v582 = vpack.c.b16 %v458, %v456
    %v583 = vpack.c.b16 %v461, %v459
    %v584 = vpack.c.b16 %v462, %v460
    %v585 = vpack.c.b16 %v465, %v463
    %v586 = vpack.c.b16 %v466, %v464
    %v587 = vpack.c.b16 %v469, %v467
    %v588 = vpack.c.b16 %v470, %v468
    %v589 = vpack.c.b16 %v473, %v471
    %v590 = vpack.c.b16 %v474, %v472
    %v591 = vpack.c.b16 %v477, %v475
    %v592 = vpack.c.b16 %v478, %v476
    %v593 = vpack.c.b16 %v481, %v479
    %v594 = vpack.c.b16 %v482, %v480
    %v595 = vpack.c.b16 %v485, %v483
    %v596 = vpack.c.b16 %v486, %v484
    %v597 = vpack.c.b16 %v489, %v487
    %v598 = vpack.c.b16 %v490, %v488
    %v599 = vpack.c.b16 %v493, %v491
    %v600 = vpack.c.b16 %v494, %v492
    %v601 = vpack.c.b16 %v497, %v495
    %v602 = vpack.c.b16 %v498, %v496
    %v603 = vpack.c.b16 %v501, %v499
    %v604 = vpack.c.b16 %v502, %v500
    %v605 = vpack.c.b16 %v505, %v503
    %v606 = vpack.c.b16 %v506, %v504
    %v607 = vpack.c.b16 %v509, %v507
    %v608 = vpack.c.b16 %v510, %v508
    %v609 = vpack.c.b16 %v513, %v511
    %v610 = vpack.c.b16 %v514, %v512
    %v611 = vpack.c.b16 %v517, %v515
    %v612 = vpack.c.b16 %v518, %v516
    %v613 = vpack.c.b16 %v521, %v519
    %v614 = vpack.c.b16 %v522, %v520
    %v615 = vpack.c.b16 %v525, %v523
    %v616 = vpack.c.b16 %v526, %v524
    %v617 = vpack.c.b16 %v529, %v527
    %v618 = vpack.c.b16 %v530, %v528
    %v619 = vpack.c.b16 %v533, %v531
    %v620 = vpack.c.b16 %v534, %v532
    %v621 = vpack.c.b16 %v537, %v535
    %v622 = vpack.c.b16 %v538, %v536
    %v623 = vpack.c.b16 %v541, %v539
    %v624 = vpack.c.b16 %v542, %v540
    %v625 = vpack.c.b16 %v545, %v543
    %v626 = vpack.c.b16 %v546, %v544
    %v627 = vpack.c.b16 %v549, %v547
    %v628 = vpack.c.b16 %v550, %v548
    %v629 = vpack.c.b16 %v553, %v551
    %v630 = vpack.c.b16 %v554, %v552
    %v631 = vpack.c.b16 %v557, %v555
    %v632 = vpack.c.b16 %v558, %v556
    %v633 = vpack.c.b16 %v561, %v559
    %v634 = vpack.c.b16 %v562, %v560
    %v635 = vpack.c.b16 %v565, %v563
    %v636 = vpack.c.b16 %v566, %v564
    %v637 = vpack.c.b16 %v569, %v567
    %v638 = vpack.c.b16 %v570, %v568
    %v639 = vpack.c.b16 %v573, %v571
    %v640 = vpack.c.b16 %v574, %v572
    %v641 = vpack.c.b16 %v577, %v575
    %v642 = vpack.c.b16 %v578, %v576
    %707 = vmatprep.subr.bf16.mxu0 %v580
    %708 = vmatpush1.bf16.msra.mxu0 %v579
    %709 = vmatprep.subr.bf16.mxu0 %v582
    %710 = vmatpush1.bf16.msra.mxu0 %v581
    %711 = vmatprep.subr.bf16.mxu0 %v584
    %712 = vmatpush1.bf16.msra.mxu0 %v583
    %713 = vmatprep.subr.bf16.mxu0 %v586
    %714 = vmatpush1.bf16.msra.mxu0 %v585
    %715 = vmatprep.subr.bf16.mxu0 %v588
    %716 = vmatpush1.bf16.msra.mxu0 %v587
    %717 = vmatprep.subr.bf16.mxu0 %v590
    %718 = vmatpush1.bf16.msra.mxu0 %v589
    %719 = vmatprep.subr.bf16.mxu0 %v592
    %720 = vmatpush1.bf16.msra.mxu0 %v591
    %721 = vmatprep.subr.bf16.mxu0 %v594
    %722 = vmatpush1.bf16.msra.mxu0 %v593
    %723 = vmatprep.subr.bf16.mxu0 %v596
    %724 = vmatpush1.bf16.msra.mxu0 %v595
    %725 = vmatprep.subr.bf16.mxu0 %v598
    %726 = vmatpush1.bf16.msra.mxu0 %v597
    %727 = vmatprep.subr.bf16.mxu0 %v600
    %728 = vmatpush1.bf16.msra.mxu0 %v599
    %729 = vmatprep.subr.bf16.mxu0 %v602
    %730 = vmatpush1.bf16.msra.mxu0 %v601
    %731 = vmatprep.subr.bf16.mxu0 %v604
    %732 = vmatpush1.bf16.msra.mxu0 %v603
    %733 = vmatprep.subr.bf16.mxu0 %v606
    %734 = vmatpush1.bf16.msra.mxu0 %v605
    %735 = vmatprep.subr.bf16.mxu0 %v608
    %736 = vmatpush1.bf16.msra.mxu0 %v607
    %737 = vmatprep.subr.bf16.mxu0 %v610
    %738 = vmatpush1.bf16.msra.mxu0 %v609
    %739 = vmatprep.mubr.bf16.mxu0 %v320
    %740 = vmatmul.mubr.bf16.gmra.mrb[0].mxu0 %v319
    %v741 = vpop.f32.mrb[0].mxu0
    %v742 = vadd.f32 0.0, %v741
    %v743 = vpop.f32.mrb[0].mxu0
    %v744 = vadd.f32 0.0, %v743
    %v745 = vpop.f32.mrb[0].mxu0
    %v746 = vadd.f32 0.0, %v745
    %v747 = vpop.f32.mrb[0].mxu0
    %v748 = vadd.f32 0.0, %v747
    %749 = vdwg.mxu0
    %750 = vmatprep.subr.bf16.mxu0 %v612
    %751 = vmatpush1.bf16.msra.mxu0 %v611
    %752 = vmatprep.subr.bf16.mxu0 %v614
    %753 = vmatpush1.bf16.msra.mxu0 %v613
    %754 = vmatprep.subr.bf16.mxu0 %v616
    %755 = vmatpush1.bf16.msra.mxu0 %v615
    %756 = vmatprep.subr.bf16.mxu0 %v618
    %757 = vmatpush1.bf16.msra.mxu0 %v617
    %758 = vmatprep.subr.bf16.mxu0 %v620
    %759 = vmatpush1.bf16.msra.mxu0 %v619
    %760 = vmatprep.subr.bf16.mxu0 %v622
    %761 = vmatpush1.bf16.msra.mxu0 %v621
    %762 = vmatprep.subr.bf16.mxu0 %v624
    %763 = vmatpush1.bf16.msra.mxu0 %v623
    %764 = vmatprep.subr.bf16.mxu0 %v626
    %765 = vmatpush1.bf16.msra.mxu0 %v625
    %766 = vmatprep.subr.bf16.mxu0 %v628
    %767 = vmatpush1.bf16.msra.mxu0 %v627
    %768 = vmatprep.subr.bf16.mxu0 %v630
    %769 = vmatpush1.bf16.msra.mxu0 %v629
    %770 = vmatprep.subr.bf16.mxu0 %v632
    %771 = vmatpush1.bf16.msra.mxu0 %v631
    %772 = vmatprep.subr.bf16.mxu0 %v634
    %773 = vmatpush1.bf16.msra.mxu0 %v633
    %774 = vmatprep.subr.bf16.mxu0 %v636
    %775 = vmatpush1.bf16.msra.mxu0 %v635
    %776 = vmatprep.subr.bf16.mxu0 %v638
    %777 = vmatpush1.bf16.msra.mxu0 %v637
    %778 = vmatprep.subr.bf16.mxu0 %v640
    %779 = vmatpush1.bf16.msra.mxu0 %v639
    %780 = vmatprep.subr.bf16.mxu0 %v642
    %781 = vmatpush1.bf16.msra.mxu0 %v641
    %782 = vmatprep.mubr.bf16.mxu0 %v322
    %783 = vmatmul.mubr.bf16.gmra.mrb[0].mxu0 %v321
    %v784 = vpop.f32.mrb[0].mxu0
    %v785 = vadd.f32 %v742, %v784
    %v786 = vpop.f32.mrb[0].mxu0
    %v787 = vadd.f32 %v744, %v786
    %v788 = vpop.f32.mrb[0].mxu0
    %v789 = vadd.f32 %v746, %v788
    %v790 = vpop.f32.mrb[0].mxu0
    %v791 = vadd.f32 %v748, %v790
    %792 = vdwg.mxu0
    %v793 = vpack.c.bf16 %v789, %v785
    %v794 = vpack.c.bf16 %v791, %v787
    %v795 = vld [vmem:[%s4] sm:$0x3]
    %v798 = vunpack.c.l.s4 1966171168
    %v799 = vunpack.c.0.s8 %v798
    %v800 = vlaneseq
    %v801 = vshrl.u32 %v800, 7
    %v802 = vsub.s32 %v799, %v801
    %v803 = vrot.slane %v795, %v802
    %v804 = vcombine.high %v803, %v803
    %v806 = vunpack.c.l.s4 1966171168
    %v807 = vunpack.c.0.s8 %v806
    %v808 = vlaneseq
    %v809 = vshrl.u32 %v808, 7
    %v810 = vsub.s32 %v807, %v809
    %v811 = vrot.slane %v803, %v810
    %v813 = vunpack.c.l.s4 1966171168
    %v814 = vunpack.c.0.s8 %v813
    %v815 = vlaneseq
    %v816 = vshrl.u32 %v815, 7
    %v817 = vsub.s32 %v814, %v816
    %v818 = vrot.slane %v804, %v817
    %v820 = vpack.i.b16 %v811, %v811
    %v822 = vlaneseq
    %v823 = vshrl.u32 %v822, 7
    %v824 = vsub.s32 0, %v823
    %v825 = vrot.slane %v820, %v824
    %v827 = vpack.i.b16 %v818, %v818
    %v829 = vlaneseq
    %v830 = vshrl.u32 %v829, 7
    %v831 = vsub.s32 0, %v830
    %v832 = vrot.slane %v827, %v831
    %v833 = vadd.bf16 %v793, %v825
    %v834 = vadd.bf16 %v794, %v832
    %v835 = vmul.bf16 %v833, 1056980736
    %v836 = vmul.bf16 %v834, 1056980736
    %v837 = vtanh.bf16.pop %v835
    %v838 = vtanh.bf16.pop %v836
    %v839 = vadd.bf16 %v837, 1065369472
    %v840 = vadd.bf16 %v838, 1065369472
    %v841 = vmul.bf16 %v835, %v839
    %v842 = vmul.bf16 %v836, %v840
    %v843 = vld [vmem:[#allocation8] sm:$0xf]
    %v844 = vld [vmem:[#allocation8 + $0x4] sm:$0xf]
    %v845 = vld [vmem:[#allocation8 + $0x8] sm:$0xf]
    %v846 = vld [vmem:[#allocation8 + $0xc] sm:$0xf]
    %v847 = vld [vmem:[#allocation8 + $0x10] sm:$0xf]
    %v848 = vld [vmem:[#allocation8 + $0x14] sm:$0xf]
    %v849 = vld [vmem:[#allocation8 + $0x18] sm:$0xf]
    %v850 = vld [vmem:[#allocation8 + $0x1c] sm:$0xf]
    %v851 = vld [vmem:[#allocation8 + $0x20] sm:$0xf]
    %v852 = vld [vmem:[#allocation8 + $0x24] sm:$0xf]
    %v853 = vld [vmem:[#allocation8 + $0x28] sm:$0xf]
    %v854 = vld [vmem:[#allocation8 + $0x2c] sm:$0xf]
    %v855 = vld [vmem:[#allocation8 + $0x30] sm:$0xf]
    %v856 = vld [vmem:[#allocation8 + $0x34] sm:$0xf]
    %v857 = vld [vmem:[#allocation8 + $0x38] sm:$0xf]
    %v858 = vld [vmem:[#allocation8 + $0x3c] sm:$0xf]
    %v859 = vld [vmem:[#allocation8 + $0x40] sm:$0xf]
    %v860 = vld [vmem:[#allocation8 + $0x44] sm:$0xf]
    %v861 = vld [vmem:[#allocation8 + $0x48] sm:$0xf]
    %v862 = vld [vmem:[#allocation8 + $0x4c] sm:$0xf]
    %v863 = vld [vmem:[#allocation8 + $0x50] sm:$0xf]
    %v864 = vld [vmem:[#allocation8 + $0x54] sm:$0xf]
    %v865 = vld [vmem:[#allocation8 + $0x58] sm:$0xf]
    %v866 = vld [vmem:[#allocation8 + $0x5c] sm:$0xf]
    %v867 = vld [vmem:[#allocation8 + $0x60] sm:$0xf]
    %v868 = vld [vmem:[#allocation8 + $0x64] sm:$0xf]
    %v869 = vld [vmem:[#allocation8 + $0x68] sm:$0xf]
    %v870 = vld [vmem:[#allocation8 + $0x6c] sm:$0xf]
    %v871 = vld [vmem:[#allocation8 + $0x70] sm:$0xf]
    %v872 = vld [vmem:[#allocation8 + $0x74] sm:$0xf]
    %v873 = vld [vmem:[#allocation8 + $0x78] sm:$0xf]
    %v874 = vld [vmem:[#allocation8 + $0x7c] sm:$0xf]
    %v907 = vunpack.c.l.b16 %v843
    %v908 = vunpack.c.l.b16 %v844
    %v909 = vunpack.c.l.b16 %v845
    %v910 = vunpack.c.l.b16 %v846
    %v911 = vunpack.c.l.b16 %v847
    %v912 = vunpack.c.l.b16 %v848
    %v913 = vunpack.c.l.b16 %v849
    %v914 = vunpack.c.l.b16 %v850
    %v915 = vunpack.c.l.b16 %v851
    %v916 = vunpack.c.l.b16 %v852
    %v917 = vunpack.c.l.b16 %v853
    %v918 = vunpack.c.l.b16 %v854
    %v919 = vunpack.c.l.b16 %v855
    %v920 = vunpack.c.l.b16 %v856
    %v921 = vunpack.c.l.b16 %v857
    %v922 = vunpack.c.l.b16 %v858
    %v923 = vunpack.c.l.b16 %v859
    %v924 = vunpack.c.l.b16 %v860
    %v925 = vunpack.c.l.b16 %v861
    %v926 = vunpack.c.l.b16 %v862
    %v927 = vunpack.c.l.b16 %v863
    %v928 = vunpack.c.l.b16 %v864
    %v929 = vunpack.c.l.b16 %v865
    %v930 = vunpack.c.l.b16 %v866
    %v931 = vunpack.c.l.b16 %v867
    %v932 = vunpack.c.l.b16 %v868
    %v933 = vunpack.c.l.b16 %v869
    %v934 = vunpack.c.l.b16 %v870
    %v935 = vunpack.c.l.b16 %v871
    %v936 = vunpack.c.l.b16 %v872
    %v937 = vunpack.c.l.b16 %v873
    %v938 = vunpack.c.l.b16 %v874
    %v939 = vpack.c.b16 %v908, %v907
    %v940 = vpack.c.b16 %v910, %v909
    %v941 = vpack.c.b16 %v912, %v911
    %v942 = vpack.c.b16 %v914, %v913
    %v943 = vpack.c.b16 %v916, %v915
    %v944 = vpack.c.b16 %v918, %v917
    %v945 = vpack.c.b16 %v920, %v919
    %v946 = vpack.c.b16 %v922, %v921
    %v947 = vpack.c.b16 %v924, %v923
    %v948 = vpack.c.b16 %v926, %v925
    %v949 = vpack.c.b16 %v928, %v927
    %v950 = vpack.c.b16 %v930, %v929
    %v951 = vpack.c.b16 %v932, %v931
    %v952 = vpack.c.b16 %v934, %v933
    %v953 = vpack.c.b16 %v936, %v935
    %v954 = vpack.c.b16 %v938, %v937
    %971 = vmatprep.subr.bf16.mxu0 0
    %972 = vmatpush1.bf16.msra.mxu0 %v939
    %973 = vmatprep.subr.bf16.mxu0 0
    %974 = vmatpush1.bf16.msra.mxu0 %v940
    %975 = vmatprep.subr.bf16.mxu0 0
    %976 = vmatpush1.bf16.msra.mxu0 %v941
    %977 = vmatprep.subr.bf16.mxu0 0
    %978 = vmatpush1.bf16.msra.mxu0 %v942
    %979 = vmatprep.subr.bf16.mxu0 0
    %980 = vmatpush1.bf16.msra.mxu0 %v943
    %981 = vmatprep.subr.bf16.mxu0 0
    %982 = vmatpush1.bf16.msra.mxu0 %v944
    %983 = vmatprep.subr.bf16.mxu0 0
    %984 = vmatpush1.bf16.msra.mxu0 %v945
    %985 = vmatprep.subr.bf16.mxu0 0
    %986 = vmatpush1.bf16.msra.mxu0 %v946
    %987 = vmatprep.subr.bf16.mxu0 0
    %988 = vmatpush1.bf16.msra.mxu0 %v947
    %989 = vmatprep.subr.bf16.mxu0 0
    %990 = vmatpush1.bf16.msra.mxu0 %v948
    %991 = vmatprep.subr.bf16.mxu0 0
    %992 = vmatpush1.bf16.msra.mxu0 %v949
    %993 = vmatprep.subr.bf16.mxu0 0
    %994 = vmatpush1.bf16.msra.mxu0 %v950
    %995 = vmatprep.subr.bf16.mxu0 0
    %996 = vmatpush1.bf16.msra.mxu0 %v951
    %997 = vmatprep.subr.bf16.mxu0 0
    %998 = vmatpush1.bf16.msra.mxu0 %v952
    %999 = vmatprep.subr.bf16.mxu0 0
    %1000 = vmatpush1.bf16.msra.mxu0 %v953
    %1001 = vmatprep.subr.bf16.mxu0 0
    %1002 = vmatpush1.bf16.msra.mxu0 %v954
    %1003 = vmatprep.mubr.bf16.mxu0 %v842
    %1004 = vmatmul.mubr.bf16.gmra.mrb[0].mxu0 %v841
    %v1005 = vpop.f32.mrb[0].mxu0
    %v1006 = vadd.f32 0.0, %v1005
    %v1007 = vpop.f32.mrb[0].mxu0
    %v1008 = vpop.f32.mrb[0].mxu0
    %v1009 = vadd.f32 0.0, %v1008
    %v1010 = vpop.f32.mrb[0].mxu0
    %1011 = vdwg.mxu0
    %v1012 = vpack.c.bf16 %v1009, %v1006
    %v1013 = vld [vmem:[%s6] sm:$0x1]
    %v1015 = vpack.i.b16 %v1013, %v1013
    %v1017 = vlaneseq
    %v1018 = vshrl.u32 %v1017, 7
    %v1019 = vsub.s32 0, %v1018
    %v1020 = vrot.slane %v1015, %v1019
    %v1021 = vadd.bf16 %v1012, %v1020
    %v1022 = vmul.bf16 %v1021, 1056980736
    %v1023 = vtanh.bf16.pop %v1022
    %v1024 = vadd.bf16 %v1023, 1065369472
    %v1025 = vmul.bf16 %v1022, %v1024
    %v1026 = vld [vmem:[#allocation10] sm:$0xf]
    %v1027 = vld [vmem:[#allocation10 + $0x4] sm:$0xf]
    %v1028 = vld [vmem:[#allocation10 + $0x8] sm:$0xf]
    %v1029 = vld [vmem:[#allocation10 + $0xc] sm:$0xf]
    %v1030 = vld [vmem:[#allocation10 + $0x10] sm:$0xf]
    %v1031 = vld [vmem:[#allocation10 + $0x14] sm:$0xf]
    %v1032 = vld [vmem:[#allocation10 + $0x18] sm:$0xf]
    %v1033 = vld [vmem:[#allocation10 + $0x1c] sm:$0xf]
    %v1034 = vld [vmem:[#allocation10 + $0x20] sm:$0xf]
    %v1035 = vld [vmem:[#allocation10 + $0x24] sm:$0xf]
    %v1036 = vld [vmem:[#allocation10 + $0x28] sm:$0xf]
    %v1037 = vld [vmem:[#allocation10 + $0x2c] sm:$0xf]
    %v1038 = vld [vmem:[#allocation10 + $0x30] sm:$0xf]
    %v1039 = vld [vmem:[#allocation10 + $0x34] sm:$0xf]
    %v1040 = vld [vmem:[#allocation10 + $0x38] sm:$0xf]
    %v1041 = vld [vmem:[#allocation10 + $0x3c] sm:$0xf]
    %v1042 = vld [vmem:[%s8] sm:$0x1]
    %v1044 = vlaneseq
    %v1045 = vshrl.u32 %v1044, 7
    %v1046 = vsub.s32 0, %v1045
    %v1047 = vrot.slane %v1042, %v1046
    %v1065 = vunpack.c.l.b16 %v1026
    %v1066 = vunpack.c.l.b16 %v1027
    %v1067 = vunpack.c.l.b16 %v1028
    %v1068 = vunpack.c.l.b16 %v1029
    %v1069 = vunpack.c.l.b16 %v1030
    %v1070 = vunpack.c.l.b16 %v1031
    %v1071 = vunpack.c.l.b16 %v1032
    %v1072 = vunpack.c.l.b16 %v1033
    %v1073 = vunpack.c.l.b16 %v1034
    %v1074 = vunpack.c.l.b16 %v1035
    %v1075 = vunpack.c.l.b16 %v1036
    %v1076 = vunpack.c.l.b16 %v1037
    %v1077 = vunpack.c.l.b16 %v1038
    %v1078 = vunpack.c.l.b16 %v1039
    %v1079 = vunpack.c.l.b16 %v1040
    %v1080 = vunpack.c.l.b16 %v1041
    %v1081 = vpack.c.b16 %v1066, %v1065
    %v1082 = vpack.c.b16 %v1068, %v1067
    %v1083 = vpack.c.b16 %v1070, %v1069
    %v1084 = vpack.c.b16 %v1072, %v1071
    %v1085 = vpack.c.b16 %v1074, %v1073
    %v1086 = vpack.c.b16 %v1076, %v1075
    %v1087 = vpack.c.b16 %v1078, %v1077
    %v1088 = vpack.c.b16 %v1080, %v1079
    %1097 = vmatprep.subr.bf16.mxu0 0
    %1098 = vmatpush1.bf16.msra.mxu0 %v1081
    %1099 = vmatprep.subr.bf16.mxu0 0
    %1100 = vmatpush1.bf16.msra.mxu0 %v1082
    %1101 = vmatprep.subr.bf16.mxu0 0
    %1102 = vmatpush1.bf16.msra.mxu0 %v1083
    %1103 = vmatprep.subr.bf16.mxu0 0
    %1104 = vmatpush1.bf16.msra.mxu0 %v1084
    %1105 = vmatprep.subr.bf16.mxu0 0
    %1106 = vmatpush1.bf16.msra.mxu0 %v1085
    %1107 = vmatprep.subr.bf16.mxu0 0
    %1108 = vmatpush1.bf16.msra.mxu0 %v1086
    %1109 = vmatprep.subr.bf16.mxu0 0
    %1110 = vmatpush1.bf16.msra.mxu0 %v1087
    %1111 = vmatprep.subr.bf16.mxu0 0
    %1112 = vmatpush1.bf16.msra.mxu0 %v1088
    %1113 = vmatprep.subr.bf16.mxu0 0
    %1114 = vmatpush1.bf16.msra.mxu0 0
    %1115 = vmatprep.subr.bf16.mxu0 0
    %1116 = vmatpush1.bf16.msra.mxu0 0
    %1117 = vmatprep.subr.bf16.mxu0 0
    %1118 = vmatpush1.bf16.msra.mxu0 0
    %1119 = vmatprep.subr.bf16.mxu0 0
    %1120 = vmatpush1.bf16.msra.mxu0 0
    %1121 = vmatprep.subr.bf16.mxu0 0
    %1122 = vmatpush1.bf16.msra.mxu0 0
    %1123 = vmatprep.subr.bf16.mxu0 0
    %1124 = vmatpush1.bf16.msra.mxu0 0
    %1125 = vmatprep.subr.bf16.mxu0 0
    %1126 = vmatpush1.bf16.msra.mxu0 0
    %1127 = vmatprep.subr.bf16.mxu0 0
    %1128 = vmatpush1.bf16.msra.mxu0 0
    %1129 = vmatprep.mubr.bf16.mxu0 0
    %1130 = vmatmul.mubr.bf16.gmra.mrb[0].mxu0 %v1025
    %v1131 = vpop.f32.mrb[0].mxu0
    %v1132 = vadd.f32 %v1047, %v1131
    %v1133 = vpop.f32.mrb[0].mxu0
    %v1134 = vpop.f32.mrb[0].mxu0
    %v1135 = vadd.f32 %v1047, %v1134
    %v1136 = vpop.f32.mrb[0].mxu0
    %1137 = vdwg.mxu0
    %1138 = vst [vmem:[#allocation11] sm:$0xff] %v1132
    %1139 = vst [vmem:[#allocation11 + $0x8] sm:$0xff] %v1135
    // Predicated region
    $region58: #{forward.1} parent=1 // pred_check
      _
    $region59: #{forward.1} parent=1 // pred_check_branch
      %1141 = sbr.rel (0) target = $region61
    $region60: #{forward.1} parent=1 // pred_region
      %s1143 = ssub.s32 256, 128
      %1144 = vsyncadd [#allocation4], %s1143
      %s1145 = sshll.u32 [#allocation11], 4
      %s1146 = int_to_ptr.vmem [resolvable:$true] %s1145
      %1151 = dma.vmem_to_hbm [thread:$0]  %s1146, 128, %s9, [#allocation4], 128, 128, 8
    $region61: #{forward.1} parent=1 // pred_fallthru
      _
    // Predicated region
    $region62: #{forward.1} parent=1 // pred_check
      _
    $region63: #{forward.1} parent=1 // pred_check_branch
      %1153 = sbr.rel (0) target = $region65
    $region64: #{forward.1} parent=1 // pred_region
      %1154 = dma.done [#allocation4], 256
    $region65: #{forward.1} parent=1 // pred_fallthru
      _
    %1155 = vsyncpa [#allocation3], 1
    %1156 = vsyncpa [#allocation6], 1
    %1157 = vsyncpa [#allocation9], 1
    %1158 = vsyncpa [#allocation4], 1

</llo_original>
